<compile_context>
chip_gen: v7x
topology: tpu7x:2x2x1
jax: 0.10.0
libtpu: 0.0.40
codegen_flags: <defaults>
</compile_context>

<pallas_src>
import jax
import jax.numpy as jnp
import numpy as np
from jax.experimental import pallas as pl
from jax.experimental.pallas import tpu as pltpu


LN_EPS = 1e-5  # nn.LayerNorm default


def bert_embedding_kernel(ids_smem,          # scalar prefetch: (B, S) int32 in SMEM
                          tt_ref,            # (1, TILE_S, 1) int32
                          tok_hbm,           # (V, D) float32, HBM (ANY)
                          pos_ref,           # (TILE_S, D) float32
                          seg_ref,           # (2, D) float32
                          gamma_ref,         # (1, D) float32
                          beta_ref,          # (1, D) float32
                          out_ref,           # (1, TILE_S, D) float32
                          gather_buf,        # VMEM scratch (TILE_S, D) float32
                          copy_sem):         # DMA semaphore, shape (1,)
    b = pl.program_id(0)
    t = pl.program_id(1)
    tile_s = gather_buf.shape[0]
    base = t * tile_s

    # --- token embedding: DMA row gather from HBM into VMEM scratch ---------
    # Issue all TILE_S row copies on one semaphore, then drain them.  Each
    # copy moves D*4 bytes; TILE_S waits == all rows have landed.
    @pl.loop(0, tile_s)
    def _issue(j):
        row = ids_smem[b, base + j]
        pltpu.make_async_copy(
            tok_hbm.at[pl.ds(row, 1), :],
            gather_buf.at[pl.ds(j, 1), :],
            copy_sem.at[0],
        ).start()

    @pl.loop(0, tile_s)
    def _drain(j):
        pltpu.make_async_copy(
            tok_hbm.at[pl.ds(0, 1), :],          # same-shape placeholder src
            gather_buf.at[pl.ds(j, 1), :],
            copy_sem.at[0],
        ).wait()

    tok_emb = gather_buf[...]                                   # (TILE_S, D)

    # --- position embedding: rows [t*TILE_S, (t+1)*TILE_S) via BlockSpec ----
    pos_emb = pos_ref[...]                                      # (TILE_S, D)

    # --- segment embedding: 2-row table, elementwise select -----------------
    # (token_type_ids are 0/1 for BERT; any nonzero id maps to segment 1.)
    tt = tt_ref[0]                                              # (TILE_S, 1)
    seg_tab = seg_ref[...]                                      # (2, D)
    seg_emb = jnp.where(tt == 0, seg_tab[0:1, :], seg_tab[1:2, :])

    x = tok_emb + pos_emb + seg_emb                             # (TILE_S, D)

    # --- LayerNorm over d_model (f32 math) -----------------------------------
    mean = jnp.mean(x, axis=-1, keepdims=True)
    xc = x - mean
    var = jnp.mean(xc * xc, axis=-1, keepdims=True)
    inv = jax.lax.rsqrt(var + LN_EPS)
    y = xc * inv * gamma_ref[...] + beta_ref[...]

    # Dropout: identity in eval mode.
    out_ref[0] = y.astype(out_ref.dtype)


def _pick_tile_s(S):
    """Largest multiple-of-8 row tile that divides S (capped at 256 rows)."""
    for cand in (256, 128, 64, 32, 16, 8):
        if S % cand == 0:
            return cand
    return S  # tiny / odd S: one tile == full sequence


@jax.jit
def bert_embedding(input_ids, token_type_ids, tok_tab, pos_tab, seg_tab,
                   gamma, beta):
    B, S = input_ids.shape
    V, D = tok_tab.shape
    tile_s = _pick_tile_s(S)
    n_tiles = S // tile_s if S % tile_s == 0 else 1

    ids = input_ids.astype(jnp.int32)                       # (B, S) -> SMEM
    tt3 = token_type_ids.astype(jnp.int32)[..., None]       # (B, S, 1)
    tok_tab_f = tok_tab.astype(jnp.float32)                 # stays in HBM
    pos_used = pos_tab[:S].astype(jnp.float32)              # rows 0..S-1
    seg_f = seg_tab.astype(jnp.float32)
    gamma2 = gamma.reshape(1, D).astype(jnp.float32)
    beta2 = beta.reshape(1, D).astype(jnp.float32)

    grid_spec = pltpu.PrefetchScalarGridSpec(
        num_scalar_prefetch=1,                               # input_ids -> SMEM
        grid=(B, n_tiles),
        in_specs=[
            pl.BlockSpec((1, tile_s, 1), lambda b, t, ids: (b, t, 0)),  # tt
            pl.BlockSpec(memory_space=pl.ANY),                          # token table (HBM)
            pl.BlockSpec((tile_s, D), lambda b, t, ids: (t, 0)),        # pos rows
            pl.BlockSpec((2, D), lambda b, t, ids: (0, 0)),             # seg table
            pl.BlockSpec((1, D), lambda b, t, ids: (0, 0)),             # gamma
            pl.BlockSpec((1, D), lambda b, t, ids: (0, 0)),             # beta
        ],
        out_specs=pl.BlockSpec((1, tile_s, D), lambda b, t, ids: (b, t, 0)),
        scratch_shapes=[
            pltpu.VMEM((tile_s, D), jnp.float32),            # gathered token rows
            pltpu.SemaphoreType.DMA((1,)),                   # shared gather sem
        ],
    )

    return pl.pallas_call(
        bert_embedding_kernel,
        out_shape=jax.ShapeDtypeStruct((B, S, D), jnp.float32),
        grid_spec=grid_spec,
        compiler_params=pltpu.CompilerParams(
            dimension_semantics=("parallel", "parallel")),
    )(ids, tt3, tok_tab_f, pos_used, seg_f, gamma2, beta2)


def reference_bert_embedding(input_ids, token_type_ids, tok_tab, pos_tab,
                             seg_tab, gamma, beta):
    B, S = input_ids.shape
    tok = tok_tab[input_ids]                       # (B, S, D)
    pos = pos_tab[jnp.arange(S)][None, :, :]       # (1, S, D)
    seg = seg_tab[token_type_ids]                  # (B, S, D)
    x = tok + pos + seg
    mean = jnp.mean(x, axis=-1, keepdims=True)
    var = jnp.mean((x - mean) ** 2, axis=-1, keepdims=True)
    return (x - mean) * jax.lax.rsqrt(var + LN_EPS) * gamma + beta


if __name__ == "__main__":
    # Small, deterministic problem.
    vocab_size = 64
    d_model = 32
    max_seq_length = 16
    batch = 2
    seq = 8

    key = jax.random.PRNGKey(0)
    k_tok, k_pos, k_seg, k_ids, k_tt = jax.random.split(key, 5)

    # Parameters (deterministic; LayerNorm weight=1, bias=0 as in nn.LayerNorm).
    tok_tab = 0.02 * jax.random.normal(k_tok, (vocab_size, d_model), jnp.float32)
    pos_tab = 0.02 * jax.random.normal(k_pos, (max_seq_length, d_model), jnp.float32)
    seg_tab = 0.02 * jax.random.normal(k_seg, (2, d_model), jnp.float32)
    gamma = jnp.ones((d_model,), jnp.float32)
    beta = jnp.zeros((d_model,), jnp.float32)

    input_ids = jax.random.randint(k_ids, (batch, seq), 0, vocab_size, jnp.int32)
    token_type_ids = jax.random.randint(k_tt, (batch, seq), 0, 2, jnp.int32)

    out = bert_embedding(input_ids, token_type_ids, tok_tab, pos_tab, seg_tab,
                         gamma, beta)
    out = jax.block_until_ready(out)

    ref = reference_bert_embedding(input_ids, token_type_ids, tok_tab, pos_tab,
                                   seg_tab, gamma, beta)
    np.testing.assert_allclose(np.asarray(out), np.asarray(ref),
                               rtol=1e-5, atol=1e-5)

    print("KERNEL_OK")
</pallas_src>

<mosaic_0001>
module attributes {stable_mosaic.version = 11 : i64} {
  func.func @bert_embedding_kernel(%arg0: i32, %arg1: i32, %arg2: memref<2x8xi32, #tpu.memory_space<smem>>, %arg3: memref<1x8x1xi32, #tpu.memory_space<vmem>>, %arg4: memref<64x32xf32, #tpu.memory_space<any>>, %arg5: memref<8x32xf32, #tpu.memory_space<vmem>>, %arg6: memref<2x32xf32, #tpu.memory_space<vmem>>, %arg7: memref<1x32xf32, #tpu.memory_space<vmem>>, %arg8: memref<1x32xf32, #tpu.memory_space<vmem>>, %arg9: memref<1x8x32xf32, #tpu.memory_space<vmem>>, %arg10: memref<8x32xf32, #tpu.memory_space<vmem>>, %arg11: memref<1x!tpu.dma_semaphore, #tpu.memory_space<semaphore_mem>>) attributes {dimension_semantics = [#tpu.dimension_semantics<parallel>, #tpu.dimension_semantics<parallel>], iteration_bounds = array<i64: 2, 1>, scalar_prefetch = 1 : i64, scratch_operands = 2 : i64, tpu.core_type = #tpu.core_type<tc>, window_params = [{transform_indices = @transform_0, window_bounds = array<i64: 1, 8, 1>}, {}, {transform_indices = @transform_2, window_bounds = array<i64: 8, 32>}, {pipeline_mode = #tpu.pipeline_mode<synchronous>, transform_indices = @transform_3, window_bounds = array<i64: 2, 32>}, {pipeline_mode = #tpu.pipeline_mode<synchronous>, transform_indices = @transform_4, window_bounds = array<i64: 1, 32>}, {pipeline_mode = #tpu.pipeline_mode<synchronous>, transform_indices = @transform_5, window_bounds = array<i64: 1, 32>}, {transform_indices = @transform_6, window_bounds = array<i64: 1, 8, 32>}]} {
    %c8_i32 = arith.constant 8 : i32
    %0 = arith.muli %arg1, %c8_i32 : i32
    %c0_i32 = arith.constant 0 : i32
    %c8_i32_0 = arith.constant 8 : i32
    %1 = arith.addi %c0_i32, %c8_i32_0 : i32
    %c1_i32 = arith.constant 1 : i32
    scf.for %arg12 = %c0_i32 to %1 step %c1_i32  : i32 {
      %c1_i32_26 = arith.constant 1 : i32
      %46 = arith.muli %arg12, %c1_i32_26 : i32
      %c0_i32_27 = arith.constant 0 : i32
      %47 = arith.addi %c0_i32_27, %46 : i32
      %48 = arith.addi %0, %47 : i32
      %49 = arith.index_cast %arg0 : i32 to index
      %50 = arith.index_cast %48 : i32 to index
      %51 = memref.load %arg2[%49, %50] : memref<2x8xi32, #tpu.memory_space<smem>>
      %c0_i32_28 = arith.constant 0 : i32
      %c0_i32_29 = arith.constant 0 : i32
      %52 = tpu.memref_slice %arg4[%51, %c0_i32_29] : memref<64x32xf32, #tpu.memory_space<any>> -> memref<1x32xf32, #tpu.memory_space<any>>
      %c0_i32_30 = arith.constant 0 : i32
      %53 = tpu.memref_slice %arg10[%47, %c0_i32_30] : memref<8x32xf32, #tpu.memory_space<vmem>> -> memref<1x32xf32, #tpu.memory_space<vmem>>
      %54 = tpu.memref_slice %arg11[%c0_i32_28] : memref<1x!tpu.dma_semaphore, #tpu.memory_space<semaphore_mem>> -> memref<1x!tpu.dma_semaphore, #tpu.memory_space<semaphore_mem>>
      %55 = tpu.memref_squeeze %54 : memref<1x!tpu.dma_semaphore, #tpu.memory_space<semaphore_mem>> -> memref<!tpu.dma_semaphore, #tpu.memory_space<semaphore_mem>>
      tpu.enqueue_dma source(%52 : memref<1x32xf32, #tpu.memory_space<any>>) target(%53 : memref<1x32xf32, #tpu.memory_space<vmem>>) target_semaphore(%55 : memref<!tpu.dma_semaphore, #tpu.memory_space<semaphore_mem>>)
    }
    %c8_i32_1 = arith.constant 8 : i32
    %c0_i32_2 = arith.constant 0 : i32
    %c8_i32_3 = arith.constant 8 : i32
    %2 = arith.addi %c0_i32_2, %c8_i32_3 : i32
    %c1_i32_4 = arith.constant 1 : i32
    scf.for %arg12 = %c0_i32_2 to %2 step %c1_i32_4  : i32 {
      %c1_i32_26 = arith.constant 1 : i32
      %46 = arith.muli %arg12, %c1_i32_26 : i32
      %c0_i32_27 = arith.constant 0 : i32
      %47 = arith.addi %c0_i32_27, %46 : i32
      %c0_i32_28 = arith.constant 0 : i32
      %c0_i32_29 = arith.constant 0 : i32
      %c0_i32_30 = arith.constant 0 : i32
      %48 = tpu.memref_slice %arg4[%c0_i32_29, %c0_i32_30] : memref<64x32xf32, #tpu.memory_space<any>> -> memref<1x32xf32, #tpu.memory_space<any>>
      %c0_i32_31 = arith.constant 0 : i32
      %49 = tpu.memref_slice %arg10[%47, %c0_i32_31] : memref<8x32xf32, #tpu.memory_space<vmem>> -> memref<1x32xf32, #tpu.memory_space<vmem>>
      %50 = tpu.memref_slice %arg11[%c0_i32_28] : memref<1x!tpu.dma_semaphore, #tpu.memory_space<semaphore_mem>> -> memref<1x!tpu.dma_semaphore, #tpu.memory_space<semaphore_mem>>
      %51 = tpu.memref_squeeze %50 : memref<1x!tpu.dma_semaphore, #tpu.memory_space<semaphore_mem>> -> memref<!tpu.dma_semaphore, #tpu.memory_space<semaphore_mem>>
      tpu.wait_dma2 semaphore(%51 : memref<!tpu.dma_semaphore, #tpu.memory_space<semaphore_mem>>) src(%48 : memref<1x32xf32, #tpu.memory_space<any>>) dst(%49 : memref<1x32xf32, #tpu.memory_space<vmem>>)
    }
    %c8_i32_5 = arith.constant 8 : i32
    %c0 = arith.constant 0 : index
    %c0_6 = arith.constant 0 : index
    %3 = vector.load %arg10[%c0, %c0_6] : memref<8x32xf32, #tpu.memory_space<vmem>>, vector<8x32xf32>
    %c0_7 = arith.constant 0 : index
    %c0_8 = arith.constant 0 : index
    %4 = vector.load %arg5[%c0_7, %c0_8] : memref<8x32xf32, #tpu.memory_space<vmem>>, vector<8x32xf32>
    %c0_9 = arith.constant 0 : index
    %c0_10 = arith.constant 0 : index
    %c0_11 = arith.constant 0 : index
    %5 = vector.load %arg3[%c0_9, %c0_10, %c0_11] : memref<1x8x1xi32, #tpu.memory_space<vmem>>, vector<1x8x1xi32>
    %6 = vector.shape_cast %5 : vector<1x8x1xi32> to vector<8x1xi32>
    %c0_12 = arith.constant 0 : index
    %c0_13 = arith.constant 0 : index
    %7 = vector.load %arg6[%c0_12, %c0_13] : memref<2x32xf32, #tpu.memory_space<vmem>>, vector<2x32xf32>
    %c0_i32_14 = arith.constant 0 : i32
    %8 = vector.broadcast %c0_i32_14 : i32 to vector<8x1xi32>
    %9 = arith.cmpi eq, %6, %8 : vector<8x1xi32>
    %10 = vector.extract_strided_slice %7 {offsets = [0, 0], sizes = [1, 32], strides = [1, 1]} : vector<2x32xf32> to vector<1x32xf32>
    %11 = vector.extract_strided_slice %7 {offsets = [1, 0], sizes = [1, 32], strides = [1, 1]} : vector<2x32xf32> to vector<1x32xf32>
    %12 = vector.shape_cast %9 : vector<8x1xi1> to vector<8x1xi1>
    %13 = vector.broadcast %12 : vector<8x1xi1> to vector<8x32xi1>
    %14 = vector.shape_cast %10 : vector<1x32xf32> to vector<1x32xf32>
    %15 = vector.broadcast %14 : vector<1x32xf32> to vector<8x32xf32>
    %16 = vector.shape_cast %11 : vector<1x32xf32> to vector<1x32xf32>
    %17 = vector.broadcast %16 : vector<1x32xf32> to vector<8x32xf32>
    %18 = arith.select %13, %15, %17 : vector<8x32xi1>, vector<8x32xf32>
    %19 = arith.addf %3, %4 : vector<8x32xf32>
    %20 = arith.addf %19, %18 : vector<8x32xf32>
    %cst = arith.constant dense<0.000000e+00> : vector<8xf32>
    %21 = vector.multi_reduction <add>, %20, %cst [1] : vector<8x32xf32> to vector<8xf32>
    %22 = vector.shape_cast %21 : vector<8xf32> to vector<8x1xf32>
    %cst_15 = arith.constant 3.200000e+01 : f32
    %23 = vector.broadcast %cst_15 : f32 to vector<8x1xf32>
    %24 = arith.divf %22, %23 : vector<8x1xf32>
    %25 = vector.broadcast %24 : vector<8x1xf32> to vector<8x32xf32>
    %26 = arith.subf %20, %25 : vector<8x32xf32>
    %27 = arith.mulf %26, %26 : vector<8x32xf32>
    %cst_16 = arith.constant dense<0.000000e+00> : vector<8xf32>
    %28 = vector.multi_reduction <add>, %27, %cst_16 [1] : vector<8x32xf32> to vector<8xf32>
    %29 = vector.shape_cast %28 : vector<8xf32> to vector<8x1xf32>
    %cst_17 = arith.constant 3.200000e+01 : f32
    %30 = vector.broadcast %cst_17 : f32 to vector<8x1xf32>
    %31 = arith.divf %29, %30 : vector<8x1xf32>
    %cst_18 = arith.constant 9.99999974E-6 : f32
    %32 = vector.broadcast %cst_18 : f32 to vector<8x1xf32>
    %33 = arith.addf %31, %32 : vector<8x1xf32>
    %34 = math.rsqrt %33 : vector<8x1xf32>
    %35 = vector.broadcast %34 : vector<8x1xf32> to vector<8x32xf32>
    %36 = arith.mulf %26, %35 : vector<8x32xf32>
    %c0_19 = arith.constant 0 : index
    %c0_20 = arith.constant 0 : index
    %37 = vector.load %arg7[%c0_19, %c0_20] : memref<1x32xf32, #tpu.memory_space<vmem>>, vector<1x32xf32>
    %38 = vector.broadcast %37 : vector<1x32xf32> to vector<8x32xf32>
    %39 = arith.mulf %36, %38 : vector<8x32xf32>
    %c0_21 = arith.constant 0 : index
    %c0_22 = arith.constant 0 : index
    %40 = vector.load %arg8[%c0_21, %c0_22] : memref<1x32xf32, #tpu.memory_space<vmem>>, vector<1x32xf32>
    %41 = vector.broadcast %40 : vector<1x32xf32> to vector<8x32xf32>
    %42 = arith.addf %39, %41 : vector<8x32xf32>
    %c0_23 = arith.constant 0 : index
    %c0_24 = arith.constant 0 : index
    %c0_25 = arith.constant 0 : index
    %43 = vector.load %arg9[%c0_23, %c0_24, %c0_25] : memref<1x8x32xf32, #tpu.memory_space<vmem>>, vector<1x8x32xf32>
    %44 = vector.shape_cast %43 : vector<1x8x32xf32> to vector<8x32xf32>
    %45 = vector.shape_cast %42 : vector<8x32xf32> to vector<1x8x32xf32>
    tpu.vector_store %arg9[%c0_23, %c0_24, %c0_25], %45 {strides = array<i32>} : memref<1x8x32xf32, #tpu.memory_space<vmem>>, vector<1x8x32xf32>,
    return
  }
  func.func @transform_0(%arg0: i32, %arg1: i32, %arg2: memref<2x8xi32, #tpu.memory_space<smem>>) -> (i32, i32, i32) {
    %c0_i32 = arith.constant 0 : i32
    %c0_i32_0 = arith.constant 0 : i32
    return %arg0, %arg1, %c0_i32 : i32, i32, i32
  }
  func.func @transform_2(%arg0: i32, %arg1: i32, %arg2: memref<2x8xi32, #tpu.memory_space<smem>>) -> (i32, i32) {
    %c0_i32 = arith.constant 0 : i32
    %c0_i32_0 = arith.constant 0 : i32
    return %arg1, %c0_i32 : i32, i32
  }
  func.func @transform_3(%arg0: i32, %arg1: i32, %arg2: memref<2x8xi32, #tpu.memory_space<smem>>) -> (i32, i32) {
    %c0_i32 = arith.constant 0 : i32
    %c0_i32_0 = arith.constant 0 : i32
    %c0_i32_1 = arith.constant 0 : i32
    return %c0_i32, %c0_i32_0 : i32, i32
  }
  func.func @transform_4(%arg0: i32, %arg1: i32, %arg2: memref<2x8xi32, #tpu.memory_space<smem>>) -> (i32, i32) {
    %c0_i32 = arith.constant 0 : i32
    %c0_i32_0 = arith.constant 0 : i32
    %c0_i32_1 = arith.constant 0 : i32
    return %c0_i32, %c0_i32_0 : i32, i32
  }
  func.func @transform_5(%arg0: i32, %arg1: i32, %arg2: memref<2x8xi32, #tpu.memory_space<smem>>) -> (i32, i32) {
    %c0_i32 = arith.constant 0 : i32
    %c0_i32_0 = arith.constant 0 : i32
    %c0_i32_1 = arith.constant 0 : i32
    return %c0_i32, %c0_i32_0 : i32, i32
  }
  func.func @transform_6(%arg0: i32, %arg1: i32, %arg2: memref<2x8xi32, #tpu.memory_space<smem>>) -> (i32, i32, i32) {
    %c0_i32 = arith.constant 0 : i32
    %c0_i32_0 = arith.constant 0 : i32
    return %arg0, %arg1, %c0_i32 : i32, i32, i32
  }
}

</mosaic_0001>

<llo_original>
// kernel: bert_embedding.1
$region0: #{bert_embedding.1}
  #allocation0 [shape = 'u32[]', space=smem, size = 0x4, offset = 0x4, fixed_abs, tag = 'smem constant byte address 0x4 - core index']
  #allocation1 [shape = 'u32[144,128]{1,0:T(1,128)}', space=vmem, size = 0x12000, scoped, tag = 'internal scratch']
  #allocation2 [shape = 'f32[8,32]{1,0:T(8,128)}', space=vmem, size = 0x1000, scoped, tag = 'scratch operand']
  #allocation3 [shape = 's32[1]{0}', space=sflag, size = 0x4, scoped, tag = 'scratch operand']
  #allocation4 [shape = 's32[1]{0}', space=sflag, size = 0x4, scoped, tag = 'scoped memory for bert_embedding.1']
  #allocation5 [shape = 'u8[1024]{0}', space=smem, size = 0x400, scoped, tag = 'prefetched SMEM operand 0']
  #allocation8 [shape = 's32[]', space=sflag, size = 0x4, offset = 0, fixed_abs, tag = 'sflag constant byte address 0x0 - dummy sync flag']
  %s0 = inlined_call_operand.vmem [shape: s32[2,8], index: 0, kind: input, shape index: {}]
  %s1 = inlined_call_operand.vmem [shape: s32[2,8,1], index: 1, kind: input, shape index: {}]
  %s2 = inlined_call_operand.vmem [shape: f32[64,32], index: 2, kind: input, shape index: {}]
  %s3 = inlined_call_operand.vmem [shape: f32[8,32], index: 3, kind: input, shape index: {}]
  %s4 = inlined_call_operand.vmem [shape: f32[2,32], index: 4, kind: input, shape index: {}]
  %s5 = inlined_call_operand.vmem [shape: f32[1,32], index: 5, kind: input, shape index: {}]
  %s6 = inlined_call_operand.vmem [shape: f32[1,32], index: 6, kind: input, shape index: {}]
  %s7 = inlined_call_operand.hbm [shape: f32[2,8,32], index: 7, kind: output, shape index: {}]
  %s8 = sld [smem:[#allocation0]]
  $region97: #{bert_embedding.1} parent=0
    _
  %s10 = ssub.s32 1, %s8
  %s11 = scalar_select 0, %s10, %s8
  %s12 = sshll.u32 %s0, 4
  %s13 = int_to_ptr.vmem [resolvable:$true] %s12
  %15 = dma.vmem_to_smem %s13, 32, [#allocation5], [#allocation4]
  %16 = dma.done [#allocation4], 32
  %17 = sfence
  $region1: #{bert_embedding.1} parent=0
    #allocation6 [shape = 'u8[8192]{0}', space=vmem, size = 0x2000, scoped, tag = 'output window, operand 0']
    #allocation7 [shape = 's32[2]{0}', space=sflag, size = 0x8, scoped, tag = 'scoped memory for bert_embedding.1']
    %18 = vsyncpa [#allocation7], 0
    %s19 = scalar_lea.sflag [#allocation7], 1
    %20 = vsyncpa %s19, 0
    loop: start=0, step=1, limit=4
    $region2: #{bert_embedding.1} parent=1 // loop_pre_header
      _
    $region3: #{bert_embedding.1} parent=1 // loop_header
      %s22 = sphi 0, %s26
      %p23 = scmp.ge.s32.totalorder %s22, 4
      %s29 = sphi 0, %s41
      %s30 = sphi 0, %s37
      %s31 = sphi 0, %s29
      %s32 = sphi 0, %s30
      %s33 = sphi 0, %s31
      %s34 = sphi 0, %s32
      %s46 = sphi 0, %s48
      %s49 = sphi 0, %s46
      %s50 = sphi 0, %s49
      %s66 = sphi 0, %s50
      %s72 = sphi 0, %s74
      %s75 = sphi 0, %s72
      %s76 = sphi 0, %s75
      %s92 = sphi 0, %s76
      %s96 = sphi 0, %s96
      %s98 = sphi 0, %s96
      %s99 = sphi 0, %s98
      %s113 = sphi 0, %s99
      %s117 = sphi 0, %s117
      %s119 = sphi 0, %s117
      %s120 = sphi 0, %s119
      %s134 = sphi 0, %s120
      %s138 = sphi 0, %s138
      %s140 = sphi 0, %s138
      %s141 = sphi 0, %s140
      %s155 = sphi 0, %s141
      %s163 = sphi 0, %s165
      %s166 = sphi 0, %s163
      %s167 = sphi 0, %s166
      %s183 = sphi 0, %s167
    $region4: #{bert_embedding.1} parent=1 // loop_header_branch
      %25 = sbr.rel (%p23) target = $region8
    $region5: #{bert_embedding.1} parent=1 // loop_body
      %s27 = ssub.s32 %s22, 1
      %s28 = ssub.s32 %s22, 2
      %s35 = sadd.s32 1, %s30
      %p36 = scmp.ge.s32.totalorder %s35, 1
      %s37 = scalar_select %p36, 0, %s35
      %s38 = sadd.s32 1, %s29
      %s39 = scalar_select %p36, %s38, %s29
      %p40 = scmp.ge.s32.totalorder %s39, 2
      %s41 = scalar_select %p40, 0, %s39
      %s42 = ssub.s32 %s29, %s41
      %s43 = ssub.s32 %s30, %s37
      %s44 = sor.u32 %s42, %s43
      %p45 = scmp.eq.s32.totalorder %s44, 0
      %s47 = sadd.s32 %s46, 1
      %s48 = scalar_select %p45, %s46, %s47
      %p51 = pneg %p45
      %p52 = scmp.eq.s32.totalorder %s22, 1
      %p53 = por %p51, %p52
      %p54 = scmp.ne.s32.totalorder %s46, %s49
      %p55 = scmp.eq.s32.totalorder %s22, 0
      %p56 = por %p54, %p55
      %p57 = scmp.ne.s32.totalorder %s46, %s49
      %p58 = scmp.eq.s32.totalorder %s27, 1
      %p59 = por %p57, %p58
      %p60 = scmp.ne.s32.totalorder %s49, %s50
      %p61 = scmp.eq.s32.totalorder %s27, 0
      %p62 = por %p60, %p61
      %p63 = scmp.ne.s32.totalorder %s49, %s50
      %p64 = scmp.eq.s32.totalorder %s28, 1
      %p65 = por %p63, %p64
      %p67 = scmp.ne.s32.totalorder %s50, %s66
      %p68 = scmp.eq.s32.totalorder %s28, 0
      %p69 = por %p67, %p68
      %s70 = ssub.s32 %s30, %s37
      %p71 = scmp.eq.s32.totalorder %s70, 0
      %s73 = sadd.s32 %s72, 1
      %s74 = scalar_select %p71, %s72, %s73
      %p77 = pneg %p71
      %p78 = scmp.eq.s32.totalorder %s22, 1
      %p79 = por %p77, %p78
      %p80 = scmp.ne.s32.totalorder %s72, %s75
      %p81 = scmp.eq.s32.totalorder %s22, 0
      %p82 = por %p80, %p81
      %p83 = scmp.ne.s32.totalorder %s72, %s75
      %p84 = scmp.eq.s32.totalorder %s27, 1
      %p85 = por %p83, %p84
      %p86 = scmp.ne.s32.totalorder %s75, %s76
      %p87 = scmp.eq.s32.totalorder %s27, 0
      %p88 = por %p86, %p87
      %p89 = scmp.ne.s32.totalorder %s75, %s76
      %p90 = scmp.eq.s32.totalorder %s28, 1
      %p91 = por %p89, %p90
      %p93 = scmp.ne.s32.totalorder %s76, %s92
      %p94 = scmp.eq.s32.totalorder %s28, 0
      %p95 = por %p93, %p94
      %s97 = sadd.s32 %s96, 1
      %p100 = scmp.eq.s32.totalorder %s22, 1
      %p101 = scmp.ne.s32.totalorder %s96, %s98
      %p102 = scmp.eq.s32.totalorder %s22, 0
      %p103 = por %p101, %p102
      %p104 = scmp.ne.s32.totalorder %s96, %s98
      %p105 = scmp.eq.s32.totalorder %s27, 1
      %p106 = por %p104, %p105
      %p107 = scmp.ne.s32.totalorder %s98, %s99
      %p108 = scmp.eq.s32.totalorder %s27, 0
      %p109 = por %p107, %p108
      %p110 = scmp.ne.s32.totalorder %s98, %s99
      %p111 = scmp.eq.s32.totalorder %s28, 1
      %p112 = por %p110, %p111
      %p114 = scmp.ne.s32.totalorder %s99, %s113
      %p115 = scmp.eq.s32.totalorder %s28, 0
      %p116 = por %p114, %p115
      %s118 = sadd.s32 %s117, 1
      %p121 = scmp.eq.s32.totalorder %s22, 1
      %p122 = scmp.ne.s32.totalorder %s117, %s119
      %p123 = scmp.eq.s32.totalorder %s22, 0
      %p124 = por %p122, %p123
      %p125 = scmp.ne.s32.totalorder %s117, %s119
      %p126 = scmp.eq.s32.totalorder %s27, 1
      %p127 = por %p125, %p126
      %p128 = scmp.ne.s32.totalorder %s119, %s120
      %p129 = scmp.eq.s32.totalorder %s27, 0
      %p130 = por %p128, %p129
      %p131 = scmp.ne.s32.totalorder %s119, %s120
      %p132 = scmp.eq.s32.totalorder %s28, 1
      %p133 = por %p131, %p132
      %p135 = scmp.ne.s32.totalorder %s120, %s134
      %p136 = scmp.eq.s32.totalorder %s28, 0
      %p137 = por %p135, %p136
      %s139 = sadd.s32 %s138, 1
      %p142 = scmp.eq.s32.totalorder %s22, 1
      %p143 = scmp.ne.s32.totalorder %s138, %s140
      %p144 = scmp.eq.s32.totalorder %s22, 0
      %p145 = por %p143, %p144
      %p146 = scmp.ne.s32.totalorder %s138, %s140
      %p147 = scmp.eq.s32.totalorder %s27, 1
      %p148 = por %p146, %p147
      %p149 = scmp.ne.s32.totalorder %s140, %s141
      %p150 = scmp.eq.s32.totalorder %s27, 0
      %p151 = por %p149, %p150
      %p152 = scmp.ne.s32.totalorder %s140, %s141
      %p153 = scmp.eq.s32.totalorder %s28, 1
      %p154 = por %p152, %p153
      %p156 = scmp.ne.s32.totalorder %s141, %s155
      %p157 = scmp.eq.s32.totalorder %s28, 0
      %p158 = por %p156, %p157
      %s159 = ssub.s32 %s29, %s41
      %s160 = ssub.s32 %s30, %s37
      %s161 = sor.u32 %s159, %s160
      %p162 = scmp.eq.s32.totalorder %s161, 0
      %s164 = sadd.s32 %s163, 1
      %s165 = scalar_select %p162, %s163, %s164
      %p168 = pneg %p162
      %p169 = scmp.eq.s32.totalorder %s22, 1
      %p170 = por %p168, %p169
      %p171 = scmp.ne.s32.totalorder %s163, %s166
      %p172 = scmp.eq.s32.totalorder %s22, 0
      %p173 = por %p171, %p172
      %p174 = scmp.ne.s32.totalorder %s163, %s166
      %p175 = scmp.eq.s32.totalorder %s27, 1
      %p176 = por %p174, %p175
      %p177 = scmp.ne.s32.totalorder %s166, %s167
      %p178 = scmp.eq.s32.totalorder %s27, 0
      %p179 = por %p177, %p178
      %p180 = scmp.ne.s32.totalorder %s166, %s167
      %p181 = scmp.eq.s32.totalorder %s28, 1
      %p182 = por %p180, %p181
      %p184 = scmp.ne.s32.totalorder %s167, %s183
      %p185 = scmp.eq.s32.totalorder %s28, 0
      %p186 = por %p184, %p185
      %p187 = scmp.le.s32.totalorder 1, %s22
      %p188 = scmp.lt.s32.totalorder %s22, 3
      %p189 = pnand %p187, %p188
      %p190 = pneg %p189
      // Predicated region
      $region9: #{bert_embedding.1} parent=5 // pred_check
        _
      $region10: #{bert_embedding.1} parent=5 // pred_check_branch
        %192 = sbr.rel (%p189) target = $region12
      $region11: #{bert_embedding.1} parent=5 // pred_region
        %s193 = ssub.s32 %s22, 1
        // Predicated region
        $region13: #{bert_embedding.1} parent=11 // pred_check
          %p194 = pneg %p88
        $region14: #{bert_embedding.1} parent=11 // pred_check_branch
          %196 = sbr.rel (%p194) target = $region16
        $region15: #{bert_embedding.1} parent=11 // pred_region
          %p197 = scmp.lt.s32.totalorder %s32, 0
          %s198 = scalar_select %p197, %s32, 0
          %s199 = smul.addr %s198, 8
          %s200 = scalar_lea.vmem %s3, %s199
        $region16: #{bert_embedding.1} parent=11 // pred_fallthru
          _
        // Predicated region
        $region17: #{bert_embedding.1} parent=11 // pred_check
          %p201 = pneg %p109
        $region18: #{bert_embedding.1} parent=11 // pred_check_branch
          %203 = sbr.rel (%p201) target = $region20
        $region19: #{bert_embedding.1} parent=11 // pred_region
          _
        $region20: #{bert_embedding.1} parent=11 // pred_fallthru
          _
        // Predicated region
        $region21: #{bert_embedding.1} parent=11 // pred_check
          %p204 = pneg %p130
        $region22: #{bert_embedding.1} parent=11 // pred_check_branch
          %206 = sbr.rel (%p204) target = $region24
        $region23: #{bert_embedding.1} parent=11 // pred_region
          _
        $region24: #{bert_embedding.1} parent=11 // pred_fallthru
          _
        // Predicated region
        $region25: #{bert_embedding.1} parent=11 // pred_check
          %p207 = pneg %p151
        $region26: #{bert_embedding.1} parent=11 // pred_check_branch
          %209 = sbr.rel (%p207) target = $region28
        $region27: #{bert_embedding.1} parent=11 // pred_region
          _
        $region28: #{bert_embedding.1} parent=11 // pred_fallthru
          _
      $region12: #{bert_embedding.1} parent=5 // pred_fallthru
        _
      %p210 = scmp.lt.s32.totalorder %s22, 2
      // Predicated region
      $region29: #{bert_embedding.1} parent=5 // pred_check
        %p211 = pneg %p210
      $region30: #{bert_embedding.1} parent=5 // pred_check_branch
        %213 = sbr.rel (%p211) target = $region32
      $region31: #{bert_embedding.1} parent=5 // pred_region
        // Predicated region
        $region33: #{bert_embedding.1} parent=31 // pred_check
          %p214 = pneg %p56
        $region34: #{bert_embedding.1} parent=31 // pred_check_branch
          %216 = sbr.rel (%p214) target = $region36
        $region35: #{bert_embedding.1} parent=31 // pred_region
          %p217 = scmp.lt.s32.totalorder %s29, 1
          %s218 = scalar_select %p217, %s29, 1
          %p219 = scmp.lt.s32.totalorder %s30, 0
          %s220 = scalar_select %p219, %s30, 0
          %s221 = sadd.s32 %s220, %s218
          %s222 = smul.addr %s221, 8
          %s223 = scalar_lea.vmem %s1, %s222
        $region36: #{bert_embedding.1} parent=31 // pred_fallthru
          _
      $region32: #{bert_embedding.1} parent=5 // pred_fallthru
        _
      %p224 = scmp.le.s32.totalorder 1, %s22
      %p225 = scmp.lt.s32.totalorder %s22, 3
      %p226 = pnand %p224, %p225
      %p227 = pneg %p226
      // Predicated region
      $region37: #{bert_embedding.1} parent=5 // pred_check
        _
      $region38: #{bert_embedding.1} parent=5 // pred_check_branch
        %229 = sbr.rel (%p226) target = $region40
      $region39: #{bert_embedding.1} parent=5 // pred_region
        %s230 = ssub.s32 %s22, 1
        %p231 = scmp.lt.s32.totalorder %s31, 1
        %s232 = scalar_select %p231, %s31, 1
        %p233 = scmp.lt.s32.totalorder %s32, 0
        %s234 = scalar_select %p233, %s32, 0
        %s235 = sadd.s32 %s234, %s232
        %s236 = smul.addr %s235, 8
        %s237 = scalar_lea.vmem %s1, %s236
        %p238 = pneg %p62
        %p239 = pneg %p59
        %p240 = scmp.lt.s32.totalorder %s32, 0
        %s241 = scalar_select %p240, %s32, 0
        %s242 = smul.addr %s241, 8
        %s243 = scalar_lea.vmem %s3, %s242
        %p244 = pneg %p88
        %p245 = pneg %p85
        %p246 = pneg %p109
        %p247 = pneg %p106
        %p248 = pneg %p130
        %p249 = pneg %p127
        %p250 = pneg %p151
        %p251 = pneg %p148
        %p252 = pneg %p179
        %p253 = pneg %p176
        %s254 = sand.u32 %s166, 1
        %s255 = scalar_lea.sflag [#allocation7], %s254
        %s256 = sand.u32 %s166, 1
        %s257 = smul.addr %s256, 8
        %s258 = scalar_lea.vmem [#allocation6], %s257
        %p259 = scmp.lt.s32.totalorder %s31, 1
        %s260 = scalar_select %p259, %s31, 1
        %p261 = scmp.lt.s32.totalorder %s32, 0
        %s262 = scalar_select %p261, %s32, 0
        %s263 = sadd.s32 %s262, %s260
        %s264 = smul.addr %s263, 8
        %s265 = scalar_lea.vmem %s1, %s264
        %p266 = scmp.lt.s32.totalorder %s32, 0
        %s267 = scalar_select %p266, %s32, 0
        %s268 = smul.addr %s267, 8
        %s269 = scalar_lea.vmem %s3, %s268
        %s270 = smul.u32 %s32, 8
        loop: start=0, step=1, limit=8
        $region41: #{bert_embedding.1} parent=39 // loop_pre_header
          _
        $region42: #{bert_embedding.1} parent=39 // loop_header
          %s272 = sphi 0, %s276
          %p273 = scmp.ge.s32.totalorder %s272, 8
        $region43: #{bert_embedding.1} parent=39 // loop_header_branch
          %275 = sbr.rel (%p273) target = $region47
        $region44: #{bert_embedding.1} parent=39 // loop_body
          %s277 = sadd.s32 %s270, %s272
          %s278 = sshra.s32 %s277, 7
          %s279 = sand.u32 %s277, 127
          %s280 = sadd.s32 %s278, %s31
          %s281 = smul.u32 %s280, 128
          %s282 = sshra.s32 %s277, 7
          %s283 = sand.u32 %s277, 127
          %s284 = sadd.s32 %s281, %s283
          %s285 = sld [smem:[#allocation5 + %s284]]
          %s286 = scalar_lea.vmem %s2, %s285
          %s287 = scalar_lea.vmem [#allocation2], %s272
          %p289 = scmp.lt.u32.totalorder 1, 8
          %p290 = pneg %p289
          // Predicated region
          $region48: #{bert_embedding.1} parent=44 // pred_check
            _
          $region49: #{bert_embedding.1} parent=44 // pred_check_branch
            %292 = sbr.rel (%p289) target = $region51
          $region50: #{bert_embedding.1} parent=44 // pred_region
            %s307 = sand.u32 1, 7
            %p308 = scmp.eq.s32.totalorder %s307, 0
            %p309 = pneg %p308
            // Predicated region
            $region63: #{bert_embedding.1} parent=50 // pred_check
              _
            $region64: #{bert_embedding.1} parent=50 // pred_check_branch
              %311 = sbr.rel (%p308) target = $region66
            $region65: #{bert_embedding.1} parent=50 // pred_region
              %s312 = sand.u32 1, 7
              %s313 = ssub.s32 1, %s312
              %s314 = scalar_lea.vmem %s286, %s313
              %s315 = ssub.s32 1, %s312
              %s316 = scalar_lea.vmem %s287, %s315 [#allocation2]
              %s317 = sshllo.u32 0, %s312
              loop: start=0, step=1, limit=1
              $region67: #{bert_embedding.1} parent=65 // loop_pre_header
                _
              $region68: #{bert_embedding.1} parent=65 // loop_header
                %s319 = sphi 0, %s323
                %p320 = scmp.ge.s32.totalorder %s319, 1
                %s324 = sphi %s314, %s314
                %s325 = sphi %s316, %s316
              $region69: #{bert_embedding.1} parent=65 // loop_header_branch
                %322 = sbr.rel (%p320) target = $region73
              $region70: #{bert_embedding.1} parent=65 // loop_body
                %v326 = vld [vmem:[%s324] sm:%s317]
                %327 = vst [vmem:[%s325] sm:%s317] %v326
              $region71: #{bert_embedding.1} parent=65 // loop_footer
                %s323 = sadd.s32 1, %s319
              $region72: #{bert_embedding.1} parent=65 // loop_footer_branch
                %318 = sbr.rel target = $region68
              $region73: #{bert_embedding.1} parent=65 // loop_exit
                _
            $region66: #{bert_embedding.1} parent=50 // pred_fallthru
              _
          $region51: #{bert_embedding.1} parent=44 // pred_fallthru
            _
          // Predicated region
          $region52: #{bert_embedding.1} parent=44 // pred_check
            %p293 = pneg %p289
          $region53: #{bert_embedding.1} parent=44 // pred_check_branch
            %295 = sbr.rel (%p293) target = $region55
          $region54: #{bert_embedding.1} parent=44 // pred_region
            %s296 = sshllo.u32 0, 1
            loop: start=0, step=1, limit=1
            $region56: #{bert_embedding.1} parent=54 // loop_pre_header
              _
            $region57: #{bert_embedding.1} parent=54 // loop_header
              %s298 = sphi 0, %s302
              %p299 = scmp.ge.s32.totalorder %s298, 1
              %s303 = sphi %s286, %s286
              %s304 = sphi %s287, %s287
            $region58: #{bert_embedding.1} parent=54 // loop_header_branch
              %301 = sbr.rel (%p299) target = $region62
            $region59: #{bert_embedding.1} parent=54 // loop_body
              %v305 = vld [vmem:[%s303] sm:%s296]
              %306 = vst [vmem:[%s304] sm:%s296] %v305
            $region60: #{bert_embedding.1} parent=54 // loop_footer
              %s302 = sadd.s32 1, %s298
            $region61: #{bert_embedding.1} parent=54 // loop_footer_branch
              %297 = sbr.rel target = $region57
            $region62: #{bert_embedding.1} parent=54 // loop_exit
              _
          $region55: #{bert_embedding.1} parent=44 // pred_fallthru
            _
          // Predicated region
          $region74: #{bert_embedding.1} parent=44 // pred_check
            _
          $region75: #{bert_embedding.1} parent=44 // pred_check_branch
            %330 = sbr.rel (0) target = $region77
          $region76: #{bert_embedding.1} parent=44 // pred_region
            %331 = vsyncadd [#allocation3], 16
          $region77: #{bert_embedding.1} parent=44 // pred_fallthru
            _
        $region45: #{bert_embedding.1} parent=39 // loop_footer
          %s276 = sadd.s32 1, %s272
        $region46: #{bert_embedding.1} parent=39 // loop_footer_branch
          %271 = sbr.rel target = $region42
        $region47: #{bert_embedding.1} parent=39 // loop_exit
          _
        loop: start=0, step=1, limit=8
        $region78: #{bert_embedding.1} parent=39 // loop_pre_header
          _
        $region79: #{bert_embedding.1} parent=39 // loop_header
          %s333 = sphi 0, %s337
          %p334 = scmp.ge.s32.totalorder %s333, 8
        $region80: #{bert_embedding.1} parent=39 // loop_header_branch
          %336 = sbr.rel (%p334) target = $region84
        $region81: #{bert_embedding.1} parent=39 // loop_body
          %s338 = smul.u32 1, 1
          %s339 = sshll.u32 %s338, 4
          %340 = dma.done [#allocation3], %s339
        $region82: #{bert_embedding.1} parent=39 // loop_footer
          %s337 = sadd.s32 1, %s333
        $region83: #{bert_embedding.1} parent=39 // loop_footer_branch
          %332 = sbr.rel target = $region79
        $region84: #{bert_embedding.1} parent=39 // loop_exit
          _
        %v341 = vld [vmem:[#allocation2] sm:$0xff]
        %v342 = vld [vmem:[%s269] sm:$0xff]
        %v343 = vld [vmem:[%s265] sm:$0xff]
        %v344 = vld [vmem:[%s4] sm:$0x3]
        %vm345 = vcmp.eq.s32.totalorder %v343, 0
        %v346 = vsel %vm345, 1, 0
        %347 = vset.pattern.permute.xlu0 0
        %348 = vperm.xlu0 %347, %v346
        %v349 = vpop.permute.xlu0 %348
        %vm350 = vcmp.eq.s32.totalorder %v349, 1
        %v351 = vlaneseq
        %v352 = vshrl.u32 %v351, 7
        %v353 = vsub.s32 0, %v352
        %v354 = vrot.slane %v344, %v353
        %v355 = vlaneseq
        %v356 = vshrl.u32 %v355, 7
        %v357 = vsub.s32 1, %v356
        %v358 = vrot.slane %v344, %v357
        %v359 = vsel %vm350, %v354, %v358
        %v360 = vadd.f32 %v341, %v342
        %v361 = vadd.f32 %v360, %v359
        %vm362 = vcmask 261120
        %v363 = vsel %vm362, %v361, 0.0
        %364 = vadd.xlane.f32.xlu0 %v363
        %v365 = vpop.xlane.xlu0 %364
        %v366 = vrcp.pop 32.0
        %v367 = vmul.f32 %v365, %v366
        %v368 = vsub.f32 %v361, %v367
        %v369 = vmul.f32 %v368, %v368
        %v370 = vsel %vm362, %v369, 0.0
        %371 = vadd.xlane.f32.xlu0 %v370
        %v372 = vpop.xlane.xlu0 %371
        %v373 = vmul.f32 %v372, %v366
        %v374 = vadd.f32 %v373, 1e-05
        %v375 = vrsqrt.pop %v374
        %v376 = vmul.f32 %v368, %v375
        %v377 = vld [vmem:[%s5] sm:$0x1]
        %v379 = vlaneseq
        %v380 = vshrl.u32 %v379, 7
        %v381 = vsub.s32 0, %v380
        %v382 = vrot.slane %v377, %v381
        %v384 = vmul.f32 %v376, %v382
        %v385 = vld [vmem:[%s6] sm:$0x1]
        %v387 = vlaneseq
        %v388 = vshrl.u32 %v387, 7
        %v389 = vsub.s32 0, %v388
        %v390 = vrot.slane %v385, %v389
        %v392 = vadd.f32 %v384, %v390
        %393 = vst.msk [vmem:[%s258] sm:$0xff] %vm362, %v392
        %s394 = sand.u32 %s166, 1
        %s395 = scalar_lea.sflag [#allocation7], %s394
        %s396 = sand.u32 %s166, 1
        %s397 = smul.addr %s396, 8
        %s398 = scalar_lea.vmem [#allocation6], %s397
        // Predicated region
        $region85: #{bert_embedding.1} parent=39 // pred_check
          %p399 = pneg %p176
        $region86: #{bert_embedding.1} parent=39 // pred_check_branch
          %401 = sbr.rel (%p399) target = $region88
        $region87: #{bert_embedding.1} parent=39 // pred_region
          %s403 = ssub.s32 128, 128
          %404 = vsyncadd %s395, %s403
          %s405 = sadd.s32 %s32, %s31
          %s406 = smul.addr %s405, 128
          %s407 = scalar_lea.hbm %s7, %s406
          %s409 = sshll.u32 %s398, 4
          %s410 = int_to_ptr.vmem [resolvable:$true] %s409
          %412 = dma.vmem_to_hbm [thread:$0]  %s410, 128, %s407, %s395
        $region88: #{bert_embedding.1} parent=39 // pred_fallthru
          _
      $region40: #{bert_embedding.1} parent=5 // pred_fallthru
        _
      %p413 = scmp.le.s32.totalorder 2, %s22
      // Predicated region
      $region89: #{bert_embedding.1} parent=5 // pred_check
        %p414 = pneg %p413
      $region90: #{bert_embedding.1} parent=5 // pred_check_branch
        %416 = sbr.rel (%p414) target = $region92
      $region91: #{bert_embedding.1} parent=5 // pred_region
        %s417 = ssub.s32 %s22, 2
        // Predicated region
        $region93: #{bert_embedding.1} parent=91 // pred_check
          %p418 = pneg %p182
        $region94: #{bert_embedding.1} parent=91 // pred_check_branch
          %420 = sbr.rel (%p418) target = $region96
        $region95: #{bert_embedding.1} parent=91 // pred_region
          %s421 = sand.u32 %s167, 1
          %s422 = scalar_lea.sflag [#allocation7], %s421
          %s423 = sand.u32 %s167, 1
          %s424 = smul.addr %s423, 8
          %s425 = scalar_lea.vmem [#allocation6], %s424
          %426 = dma.done %s422, 128
        $region96: #{bert_embedding.1} parent=91 // pred_fallthru
          _
      $region92: #{bert_embedding.1} parent=5 // pred_fallthru
        _
    $region6: #{bert_embedding.1} parent=1 // loop_footer
      %s26 = sadd.s32 1, %s22
    $region7: #{bert_embedding.1} parent=1 // loop_footer_branch
      %21 = sbr.rel target = $region3
    $region8: #{bert_embedding.1} parent=1 // loop_exit
      _
    %427 = vsyncpa [#allocation7], 1
    %s428 = scalar_lea.sflag [#allocation7], 1
    %429 = vsyncpa %s428, 1
  %430 = vsyncmov [#allocation3]
  %s431 = vpop.sfrf %430
  %p432 = scmp.eq.s32.totalorder %s431, 0
  %p433 = pneg %p432
  %435 = shalt.err (%p433)

</llo_original>
